<compile_context>
chip_gen: v7x
topology: tpu7x:2x2x1
jax: 0.10.0
libtpu: 0.0.40
codegen_flags: <defaults>
</compile_context>

<pallas_src>
import jax
import jax.numpy as jnp
from jax.experimental import pallas as pl
from jax.experimental.pallas import tpu as pltpu


def _round_up(x, m):
    return ((x + m - 1) // m) * m


# ----------------------------- Pallas kernel --------------------------------
def slm_mlp_kernel(x_ref,
                   w1, b1, w2, b2, w3, b3, w4, b4, w5, b5,
                   out_ref):
    # x_ref: (7, tb) f32, out_ref: (1, tb) f32.  BN is pre-folded into W, b.
    # Layer 1: Linear(7,256)+BN+ReLU  (bf16 MXU operands, f32 accumulate)
    h = jnp.dot(w1[...], x_ref[...].astype(jnp.bfloat16),
                preferred_element_type=jnp.float32) + b1[...]
    h = jnp.maximum(h, 0.0)
    # Layer 2: Linear(256,128)+BN+ReLU
    h = jnp.dot(w2[...], h.astype(jnp.bfloat16),
                preferred_element_type=jnp.float32) + b2[...]
    h = jnp.maximum(h, 0.0)
    # Layer 3: Linear(128,64)+BN+ReLU
    h = jnp.dot(w3[...], h.astype(jnp.bfloat16),
                preferred_element_type=jnp.float32) + b3[...]
    h = jnp.maximum(h, 0.0)
    # Layer 4: Linear(64,32)+BN+ReLU
    h = jnp.dot(w4[...], h.astype(jnp.bfloat16),
                preferred_element_type=jnp.float32) + b4[...]
    h = jnp.maximum(h, 0.0)
    # TODO(synk): nn.Dropout(p=0.2) is identity in eval mode; not applied here.
    # Layer 5: Linear(32,1) as VPU multiply + sublane reduce -> (1, tb),
    # lane-dense output block; scalar bias read from SMEM.
    z = jnp.sum(h * w5[...], axis=0, keepdims=True) + b5[0, 0]
    out_ref[...] = 3.0 * jax.nn.sigmoid(z)


# ------------------------------ Wrapper --------------------------------------
def slm_forward(x, params, *, tb=2048):
    """x = (features [B,7], pulsar_data [B,7]) -> (target1 [B], target1_real [B])."""
    features, pulsar_data = x
    B = features.shape[0]
    assert tb % 128 == 0, "batch tile must be a multiple of 128 (lane width)"

    b128 = _round_up(B, 128)
    tb_eff = min(tb, b128)                    # don't over-tile tiny batches
    # v7x megacore: ensure >= 2 grid steps whenever the batch spans >= 2 lane
    # tiles, so ("parallel",) semantics can shard steps across both TCs.
    if b128 >= 2 * 128 and _round_up(B, tb_eff) // tb_eff < 2:
        tb_eff = _round_up(b128 // 2, 128)
    B_pad = _round_up(B, tb_eff)              # pad ragged batches (sliced off below)
    grid = B_pad // tb_eff

    # Batch on the lane axis: (7, B_pad).  Padded columns produce garbage that
    # is sliced away after the call.  (allow_input_fusion below lets XLA fold
    # this transpose into the pallas_call operand when jitted with a producer.)
    xt = jnp.transpose(features.astype(jnp.float32), (1, 0))
    if B_pad != B:
        xt = jnp.pad(xt, ((0, 0), (0, B_pad - B)))

    in_specs = [pl.BlockSpec((7, tb_eff), lambda i: (0, i))]
    for p in params[:-1]:                     # weights + vector biases: VMEM, full-extent
        in_specs.append(pl.BlockSpec(p.shape, lambda i, _nd=p.ndim: (0,) * _nd))
    # Final (1,1) scalar bias b5: SMEM instead of a lane-padded VMEM block.
    in_specs.append(pl.BlockSpec(memory_space=pltpu.MemorySpace.SMEM))

    flops = 2 * (7 * 256 + 256 * 128 + 128 * 64 + 64 * 32 + 32 * 1) * B_pad
    weight_bytes = sum(int(p.size) * p.dtype.itemsize for p in params)
    cost = pl.CostEstimate(flops=flops,
                           transcendentals=B_pad,              # sigmoid exp
                           bytes_accessed=32 * B_pad + weight_bytes)

    mlp = pl.pallas_call(
        slm_mlp_kernel,
        out_shape=jax.ShapeDtypeStruct((1, B_pad), jnp.float32),
        grid=(grid,),
        in_specs=in_specs,
        out_specs=pl.BlockSpec((1, tb_eff), lambda i: (0, i)),
        compiler_params=pltpu.CompilerParams(
            dimension_semantics=("parallel",),        # shards grid across v7x TCs
            vmem_limit_bytes=32 * 1024 * 1024,        # v5e parity with v6e/v7x default
            allow_input_fusion=[True] + [False] * len(params)),
        cost_estimate=cost,
    )
    out = mlp(xt, *params)

    target1 = out[0, :B]
    # Glue: torch.transpose + unpack just reads column 6 of pulsar_data.
    target1_real = pulsar_data[:, 6]
    return target1, target1_real


# --------------------------- Parameter init ----------------------------------
def init_params(key):
    """PyTorch-style init; eval-mode BatchNorm folded into the linear layers.

    Fold (general running stats): scale = gamma / sqrt(running_var + eps),
    W' = scale[:,None] * W,  b' = (b - running_mean) * scale + beta.
    Weights are stored [out, in] (kernel computes W @ x); all matmul-layer
    weights in bf16 (MXU operands), biases stay f32.
    """
    dims = [7, 256, 128, 64, 32, 1]
    eps = 1e-5
    keys = jax.random.split(key, 40)
    ki = 0
    params = []
    for li in range(5):
        fan_in, fan_out = dims[li], dims[li + 1]
        bound = 1.0 / (fan_in ** 0.5)
        w = jax.random.uniform(keys[ki], (fan_out, fan_in), jnp.float32,
                               -bound, bound); ki += 1
        b = jax.random.uniform(keys[ki], (fan_out,), jnp.float32,
                               -bound, bound); ki += 1
        if li < 4:  # BN after the first four linears
            gamma = 1.0 + 0.1 * jax.random.normal(keys[ki], (fan_out,),
                                                  jnp.float32); ki += 1
            beta = 0.1 * jax.random.normal(keys[ki], (fan_out,),
                                           jnp.float32); ki += 1
            running_mean = jnp.zeros((fan_out,), jnp.float32)
            running_var = jnp.ones((fan_out,), jnp.float32)
            scale = gamma / jnp.sqrt(running_var + eps)
            w = w * scale[:, None]
            b = (b - running_mean) * scale + beta
            params += [w.astype(jnp.bfloat16), b.reshape(fan_out, 1)]
        else:
            # Final Linear(32,1): stored as an (in, 1) f32 column for the VPU path.
            params += [w.reshape(fan_in, 1), b.reshape(1, 1)]
    return params


# --------------------------- Pure-JAX reference -------------------------------
def slm_reference(features, params):
    w1, b1, w2, b2, w3, b3, w4, b4, w5, b5 = params

    def lin_relu(h, w, b):
        # Emulate bf16 MXU operands with f32 accumulation.
        h = h.astype(jnp.bfloat16).astype(jnp.float32)
        return jnp.maximum(h @ w.astype(jnp.float32).T + b[:, 0][None, :], 0.0)

    h = lin_relu(features, w1, b1)
    h = lin_relu(h, w2, b2)
    h = lin_relu(h, w3, b3)
    h = lin_relu(h, w4, b4)
    z = h @ w5[:, 0] + b5[0, 0]
    return 3.0 * jax.nn.sigmoid(z)


# --------------------------------- Main ---------------------------------------
if __name__ == "__main__":
    key = jax.random.PRNGKey(0)
    k_feat, k_puls, k_param = jax.random.split(key, 3)

    B = 16
    features = jax.random.normal(k_feat, (B, 7), jnp.float32)
    pulsar_data = jax.random.normal(k_puls, (B, 7), jnp.float32)

    params = init_params(k_param)

    target1, target1_real = slm_forward((features, pulsar_data), params)
    jax.block_until_ready((target1, target1_real))

    assert target1.shape == (B,)
    assert target1_real.shape == (B,)
    assert bool(jnp.all((target1 >= 0.0) & (target1 <= 3.0)))

    ref = slm_reference(features, params)
    assert bool(jnp.allclose(target1, ref, atol=1e-2, rtol=1e-2)), \
        float(jnp.max(jnp.abs(target1 - ref)))
    assert bool(jnp.allclose(target1_real, pulsar_data[:, 6]))

    print("KERNEL_OK")
</pallas_src>

<mosaic_0001>
module attributes {stable_mosaic.version = 11 : i64} {
  func.func @slm_mlp_kernel(%arg0: i32, %arg1: memref<7x128xf32, #tpu.memory_space<vmem>>, %arg2: memref<256x7xbf16, #tpu.memory_space<vmem>>, %arg3: memref<256x1xf32, #tpu.memory_space<vmem>>, %arg4: memref<128x256xbf16, #tpu.memory_space<vmem>>, %arg5: memref<128x1xf32, #tpu.memory_space<vmem>>, %arg6: memref<64x128xbf16, #tpu.memory_space<vmem>>, %arg7: memref<64x1xf32, #tpu.memory_space<vmem>>, %arg8: memref<32x64xbf16, #tpu.memory_space<vmem>>, %arg9: memref<32x1xf32, #tpu.memory_space<vmem>>, %arg10: memref<32x1xf32, #tpu.memory_space<vmem>>, %arg11: memref<1x1xf32, #tpu.memory_space<smem>>, %arg12: memref<1x128xf32, #tpu.memory_space<vmem>>) attributes {dimension_semantics = [#tpu.dimension_semantics<parallel>], iteration_bounds = array<i64: 1>, scalar_prefetch = 0 : i64, scratch_operands = 0 : i64, tpu.core_type = #tpu.core_type<tc>, window_params = [{transform_indices = @transform_0, window_bounds = array<i64: 7, 128>}, {pipeline_mode = #tpu.pipeline_mode<synchronous>, transform_indices = @transform_1, window_bounds = array<i64: 256, 7>}, {pipeline_mode = #tpu.pipeline_mode<synchronous>, transform_indices = @transform_2, window_bounds = array<i64: 256, 1>}, {pipeline_mode = #tpu.pipeline_mode<synchronous>, transform_indices = @transform_3, window_bounds = array<i64: 128, 256>}, {pipeline_mode = #tpu.pipeline_mode<synchronous>, transform_indices = @transform_4, window_bounds = array<i64: 128, 1>}, {pipeline_mode = #tpu.pipeline_mode<synchronous>, transform_indices = @transform_5, window_bounds = array<i64: 64, 128>}, {pipeline_mode = #tpu.pipeline_mode<synchronous>, transform_indices = @transform_6, window_bounds = array<i64: 64, 1>}, {pipeline_mode = #tpu.pipeline_mode<synchronous>, transform_indices = @transform_7, window_bounds = array<i64: 32, 64>}, {pipeline_mode = #tpu.pipeline_mode<synchronous>, transform_indices = @transform_8, window_bounds = array<i64: 32, 1>}, {pipeline_mode = #tpu.pipeline_mode<synchronous>, transform_indices = @transform_9, window_bounds = array<i64: 32, 1>}, {transform_indices = @transform_10, window_bounds = array<i64: 1, 1>}, {transform_indices = @transform_11, window_bounds = array<i64: 1, 128>}]} {
    %c0 = arith.constant 0 : index
    %c0_0 = arith.constant 0 : index
    %0 = vector.load %arg2[%c0, %c0_0] : memref<256x7xbf16, #tpu.memory_space<vmem>>, vector<256x7xbf16>
    %c0_1 = arith.constant 0 : index
    %c0_2 = arith.constant 0 : index
    %1 = vector.load %arg1[%c0_1, %c0_2] : memref<7x128xf32, #tpu.memory_space<vmem>>, vector<7x128xf32>
    %2 = arith.truncf %1 : vector<7x128xf32> to vector<7x128xbf16>
    %cst = arith.constant dense<0.000000e+00> : vector<256x128xf32>
    %3 = tpu.matmul %0, %2, %cst {dimension_numbers = #tpu.dot_dimension_numbers<[1], [0], [0], [1], [0, 0, 1, 1], [], []>} : vector<256x7xbf16>, vector<7x128xbf16>, vector<256x128xf32> -> vector<256x128xf32>
    %c0_3 = arith.constant 0 : index
    %c0_4 = arith.constant 0 : index
    %4 = vector.load %arg3[%c0_3, %c0_4] : memref<256x1xf32, #tpu.memory_space<vmem>>, vector<256x1xf32>
    %5 = vector.broadcast %4 : vector<256x1xf32> to vector<256x128xf32>
    %6 = arith.addf %3, %5 : vector<256x128xf32>
    %cst_5 = arith.constant 0.000000e+00 : f32
    %7 = vector.broadcast %cst_5 : f32 to vector<256x128xf32>
    %8 = arith.maximumf %6, %7 : vector<256x128xf32>
    %c0_6 = arith.constant 0 : index
    %c0_7 = arith.constant 0 : index
    %9 = vector.load %arg4[%c0_6, %c0_7] : memref<128x256xbf16, #tpu.memory_space<vmem>>, vector<128x256xbf16>
    %10 = arith.truncf %8 : vector<256x128xf32> to vector<256x128xbf16>
    %cst_8 = arith.constant dense<0.000000e+00> : vector<128x128xf32>
    %11 = tpu.matmul %9, %10, %cst_8 {dimension_numbers = #tpu.dot_dimension_numbers<[1], [0], [0], [1], [0, 0, 1, 1], [], []>} : vector<128x256xbf16>, vector<256x128xbf16>, vector<128x128xf32> -> vector<128x128xf32>
    %c0_9 = arith.constant 0 : index
    %c0_10 = arith.constant 0 : index
    %12 = vector.load %arg5[%c0_9, %c0_10] : memref<128x1xf32, #tpu.memory_space<vmem>>, vector<128x1xf32>
    %13 = vector.broadcast %12 : vector<128x1xf32> to vector<128x128xf32>
    %14 = arith.addf %11, %13 : vector<128x128xf32>
    %cst_11 = arith.constant 0.000000e+00 : f32
    %15 = vector.broadcast %cst_11 : f32 to vector<128x128xf32>
    %16 = arith.maximumf %14, %15 : vector<128x128xf32>
    %c0_12 = arith.constant 0 : index
    %c0_13 = arith.constant 0 : index
    %17 = vector.load %arg6[%c0_12, %c0_13] : memref<64x128xbf16, #tpu.memory_space<vmem>>, vector<64x128xbf16>
    %18 = arith.truncf %16 : vector<128x128xf32> to vector<128x128xbf16>
    %cst_14 = arith.constant dense<0.000000e+00> : vector<64x128xf32>
    %19 = tpu.matmul %17, %18, %cst_14 {dimension_numbers = #tpu.dot_dimension_numbers<[1], [0], [0], [1], [0, 0, 1, 1], [], []>} : vector<64x128xbf16>, vector<128x128xbf16>, vector<64x128xf32> -> vector<64x128xf32>
    %c0_15 = arith.constant 0 : index
    %c0_16 = arith.constant 0 : index
    %20 = vector.load %arg7[%c0_15, %c0_16] : memref<64x1xf32, #tpu.memory_space<vmem>>, vector<64x1xf32>
    %21 = vector.broadcast %20 : vector<64x1xf32> to vector<64x128xf32>
    %22 = arith.addf %19, %21 : vector<64x128xf32>
    %cst_17 = arith.constant 0.000000e+00 : f32
    %23 = vector.broadcast %cst_17 : f32 to vector<64x128xf32>
    %24 = arith.maximumf %22, %23 : vector<64x128xf32>
    %c0_18 = arith.constant 0 : index
    %c0_19 = arith.constant 0 : index
    %25 = vector.load %arg8[%c0_18, %c0_19] : memref<32x64xbf16, #tpu.memory_space<vmem>>, vector<32x64xbf16>
    %26 = arith.truncf %24 : vector<64x128xf32> to vector<64x128xbf16>
    %cst_20 = arith.constant dense<0.000000e+00> : vector<32x128xf32>
    %27 = tpu.matmul %25, %26, %cst_20 {dimension_numbers = #tpu.dot_dimension_numbers<[1], [0], [0], [1], [0, 0, 1, 1], [], []>} : vector<32x64xbf16>, vector<64x128xbf16>, vector<32x128xf32> -> vector<32x128xf32>
    %c0_21 = arith.constant 0 : index
    %c0_22 = arith.constant 0 : index
    %28 = vector.load %arg9[%c0_21, %c0_22] : memref<32x1xf32, #tpu.memory_space<vmem>>, vector<32x1xf32>
    %29 = vector.broadcast %28 : vector<32x1xf32> to vector<32x128xf32>
    %30 = arith.addf %27, %29 : vector<32x128xf32>
    %cst_23 = arith.constant 0.000000e+00 : f32
    %31 = vector.broadcast %cst_23 : f32 to vector<32x128xf32>
    %32 = arith.maximumf %30, %31 : vector<32x128xf32>
    %c0_24 = arith.constant 0 : index
    %c0_25 = arith.constant 0 : index
    %33 = vector.load %arg10[%c0_24, %c0_25] : memref<32x1xf32, #tpu.memory_space<vmem>>, vector<32x1xf32>
    %34 = vector.broadcast %33 : vector<32x1xf32> to vector<32x128xf32>
    %35 = arith.mulf %32, %34 : vector<32x128xf32>
    %cst_26 = arith.constant dense<0.000000e+00> : vector<128xf32>
    %36 = vector.multi_reduction <add>, %35, %cst_26 [0] : vector<32x128xf32> to vector<128xf32>
    %37 = vector.shape_cast %36 : vector<128xf32> to vector<1x128xf32>
    %c0_27 = arith.constant 0 : index
    %c0_28 = arith.constant 0 : index
    %38 = memref.load %arg11[%c0_27, %c0_28] : memref<1x1xf32, #tpu.memory_space<smem>>
    %39 = vector.broadcast %38 : f32 to vector<1x128xf32>
    %40 = arith.addf %37, %39 : vector<1x128xf32>
    %41 = arith.negf %40 : vector<1x128xf32>
    %42 = math.exp %41 : vector<1x128xf32>
    %cst_29 = arith.constant 1.000000e+00 : f32
    %43 = vector.broadcast %cst_29 : f32 to vector<1x128xf32>
    %44 = arith.addf %43, %42 : vector<1x128xf32>
    %45 = arith.divf %43, %44 : vector<1x128xf32>
    %cst_30 = arith.constant 3.000000e+00 : f32
    %46 = vector.broadcast %cst_30 : f32 to vector<1x128xf32>
    %47 = arith.mulf %46, %45 : vector<1x128xf32>
    %c0_31 = arith.constant 0 : index
    %c0_32 = arith.constant 0 : index
    %48 = vector.load %arg12[%c0_31, %c0_32] : memref<1x128xf32, #tpu.memory_space<vmem>>, vector<1x128xf32>
    tpu.vector_store %arg12[%c0_31, %c0_32], %47 {strides = array<i32>} : memref<1x128xf32, #tpu.memory_space<vmem>>, vector<1x128xf32>,
    return
  }
  func.func @transform_0(%arg0: i32) -> (i32, i32) {
    %c0_i32 = arith.constant 0 : i32
    %c0_i32_0 = arith.constant 0 : i32
    return %c0_i32, %arg0 : i32, i32
  }
  func.func @transform_1(%arg0: i32) -> (i32, i32) {
    %c0_i32 = arith.constant 0 : i32
    %c0_i32_0 = arith.constant 0 : i32
    %c0_i32_1 = arith.constant 0 : i32
    return %c0_i32, %c0_i32_0 : i32, i32
  }
  func.func @transform_2(%arg0: i32) -> (i32, i32) {
    %c0_i32 = arith.constant 0 : i32
    %c0_i32_0 = arith.constant 0 : i32
    %c0_i32_1 = arith.constant 0 : i32
    return %c0_i32, %c0_i32_0 : i32, i32
  }
  func.func @transform_3(%arg0: i32) -> (i32, i32) {
    %c0_i32 = arith.constant 0 : i32
    %c0_i32_0 = arith.constant 0 : i32
    %c0_i32_1 = arith.constant 0 : i32
    return %c0_i32, %c0_i32_0 : i32, i32
  }
  func.func @transform_4(%arg0: i32) -> (i32, i32) {
    %c0_i32 = arith.constant 0 : i32
    %c0_i32_0 = arith.constant 0 : i32
    %c0_i32_1 = arith.constant 0 : i32
    return %c0_i32, %c0_i32_0 : i32, i32
  }
  func.func @transform_5(%arg0: i32) -> (i32, i32) {
    %c0_i32 = arith.constant 0 : i32
    %c0_i32_0 = arith.constant 0 : i32
    %c0_i32_1 = arith.constant 0 : i32
    return %c0_i32, %c0_i32_0 : i32, i32
  }
  func.func @transform_6(%arg0: i32) -> (i32, i32) {
    %c0_i32 = arith.constant 0 : i32
    %c0_i32_0 = arith.constant 0 : i32
    %c0_i32_1 = arith.constant 0 : i32
    return %c0_i32, %c0_i32_0 : i32, i32
  }
  func.func @transform_7(%arg0: i32) -> (i32, i32) {
    %c0_i32 = arith.constant 0 : i32
    %c0_i32_0 = arith.constant 0 : i32
    %c0_i32_1 = arith.constant 0 : i32
    return %c0_i32, %c0_i32_0 : i32, i32
  }
  func.func @transform_8(%arg0: i32) -> (i32, i32) {
    %c0_i32 = arith.constant 0 : i32
    %c0_i32_0 = arith.constant 0 : i32
    %c0_i32_1 = arith.constant 0 : i32
    return %c0_i32, %c0_i32_0 : i32, i32
  }
  func.func @transform_9(%arg0: i32) -> (i32, i32) {
    %c0_i32 = arith.constant 0 : i32
    %c0_i32_0 = arith.constant 0 : i32
    %c0_i32_1 = arith.constant 0 : i32
    return %c0_i32, %c0_i32_0 : i32, i32
  }
  func.func @transform_10(%arg0: i32) -> (i32, i32) {
    %c0_i32 = arith.constant 0 : i32
    %c0_i32_0 = arith.constant 0 : i32
    %c0_i32_1 = arith.constant 0 : i32
    return %c0_i32, %c0_i32_0 : i32, i32
  }
  func.func @transform_11(%arg0: i32) -> (i32, i32) {
    %c0_i32 = arith.constant 0 : i32
    %c0_i32_0 = arith.constant 0 : i32
    return %c0_i32, %arg0 : i32, i32
  }
}

</mosaic_0001>

<llo_original>
// kernel: tpu_custom_call.1
$region0: #{tpu_custom_call.1}
  #allocation0 [shape = 'u32[]', space=smem, size = 0x4, offset = 0x4, fixed_abs, tag = 'smem constant byte address 0x4 - core index']
  #allocation1 [shape = 'u32[144,128]{1,0:T(1,128)}', space=vmem, size = 0x12000, scoped, tag = 'internal scratch']
  #allocation2 [shape = 'f32[1,1]{1,0:T(1,128)S(6)}', space=smem, size = 0x200, scoped, tag = 'scoped memory for tpu_custom_call.1']
  %s0 = inlined_call_operand.vmem [shape: f32[7,128], index: 0, kind: input, shape index: {}]
  %s1 = inlined_call_operand.vmem [shape: bf16[256,7], index: 1, kind: input, shape index: {}]
  %s2 = inlined_call_operand.vmem [shape: f32[256,1], index: 2, kind: input, shape index: {}]
  %s3 = inlined_call_operand.vmem [shape: bf16[128,256], index: 3, kind: input, shape index: {}]
  %s4 = inlined_call_operand.vmem [shape: f32[128,1], index: 4, kind: input, shape index: {}]
  %s5 = inlined_call_operand.vmem [shape: bf16[64,128], index: 5, kind: input, shape index: {}]
  %s6 = inlined_call_operand.vmem [shape: f32[64,1], index: 6, kind: input, shape index: {}]
  %s7 = inlined_call_operand.vmem [shape: bf16[32,64], index: 7, kind: input, shape index: {}]
  %s8 = inlined_call_operand.vmem [shape: f32[32,1], index: 8, kind: input, shape index: {}]
  %s9 = inlined_call_operand.vmem [shape: f32[32,1], index: 9, kind: input, shape index: {}]
  %s10 = inlined_call_operand.<no memory space> [shape: f32[1,1], index: 10, kind: input, shape index: {}]
  %s11 = inlined_call_operand.hbm [shape: f32[1,128], index: 11, kind: output, shape index: {}]
  %s12 = sld [smem:[#allocation0]]
  $region54: #{tpu_custom_call.1} parent=0
    _
  %s14 = ssub.s32 1, %s12
  %s15 = scalar_select 0, %s14, %s12
  %16 = sst [smem:[#allocation2]] %s10
  $region1: #{tpu_custom_call.1} parent=0
    #allocation3 [shape = 'u8[512]{0}', space=vmem, size = 0x400, scoped, tag = 'output window, operand 0, single buffered']
    #allocation4 [shape = 's32[1]{0}', space=sflag, size = 0x4, scoped, tag = 'scoped memory for tpu_custom_call.1']
    %17 = vsyncpa [#allocation4], 0
    // Predicated region
    $region2: #{tpu_custom_call.1} parent=1 // pred_check
      _
    $region3: #{tpu_custom_call.1} parent=1 // pred_check_branch
      %19 = sbr.rel (0) target = $region5
    $region4: #{tpu_custom_call.1} parent=1 // pred_region
      _
    $region5: #{tpu_custom_call.1} parent=1 // pred_fallthru
      _
    // Predicated region
    $region6: #{tpu_custom_call.1} parent=1 // pred_check
      _
    $region7: #{tpu_custom_call.1} parent=1 // pred_check_branch
      %21 = sbr.rel (0) target = $region9
    $region8: #{tpu_custom_call.1} parent=1 // pred_region
      _
    $region9: #{tpu_custom_call.1} parent=1 // pred_fallthru
      _
    // Predicated region
    $region10: #{tpu_custom_call.1} parent=1 // pred_check
      _
    $region11: #{tpu_custom_call.1} parent=1 // pred_check_branch
      %23 = sbr.rel (0) target = $region13
    $region12: #{tpu_custom_call.1} parent=1 // pred_region
      _
    $region13: #{tpu_custom_call.1} parent=1 // pred_fallthru
      _
    // Predicated region
    $region14: #{tpu_custom_call.1} parent=1 // pred_check
      _
    $region15: #{tpu_custom_call.1} parent=1 // pred_check_branch
      %25 = sbr.rel (0) target = $region17
    $region16: #{tpu_custom_call.1} parent=1 // pred_region
      _
    $region17: #{tpu_custom_call.1} parent=1 // pred_fallthru
      _
    // Predicated region
    $region18: #{tpu_custom_call.1} parent=1 // pred_check
      _
    $region19: #{tpu_custom_call.1} parent=1 // pred_check_branch
      %27 = sbr.rel (0) target = $region21
    $region20: #{tpu_custom_call.1} parent=1 // pred_region
      _
    $region21: #{tpu_custom_call.1} parent=1 // pred_fallthru
      _
    // Predicated region
    $region22: #{tpu_custom_call.1} parent=1 // pred_check
      _
    $region23: #{tpu_custom_call.1} parent=1 // pred_check_branch
      %29 = sbr.rel (0) target = $region25
    $region24: #{tpu_custom_call.1} parent=1 // pred_region
      _
    $region25: #{tpu_custom_call.1} parent=1 // pred_fallthru
      _
    // Predicated region
    $region26: #{tpu_custom_call.1} parent=1 // pred_check
      _
    $region27: #{tpu_custom_call.1} parent=1 // pred_check_branch
      %31 = sbr.rel (0) target = $region29
    $region28: #{tpu_custom_call.1} parent=1 // pred_region
      _
    $region29: #{tpu_custom_call.1} parent=1 // pred_fallthru
      _
    // Predicated region
    $region30: #{tpu_custom_call.1} parent=1 // pred_check
      _
    $region31: #{tpu_custom_call.1} parent=1 // pred_check_branch
      %33 = sbr.rel (0) target = $region33
    $region32: #{tpu_custom_call.1} parent=1 // pred_region
      _
    $region33: #{tpu_custom_call.1} parent=1 // pred_fallthru
      _
    // Predicated region
    $region34: #{tpu_custom_call.1} parent=1 // pred_check
      _
    $region35: #{tpu_custom_call.1} parent=1 // pred_check_branch
      %35 = sbr.rel (0) target = $region37
    $region36: #{tpu_custom_call.1} parent=1 // pred_region
      _
    $region37: #{tpu_custom_call.1} parent=1 // pred_fallthru
      _
    // Predicated region
    $region38: #{tpu_custom_call.1} parent=1 // pred_check
      _
    $region39: #{tpu_custom_call.1} parent=1 // pred_check_branch
      %37 = sbr.rel (0) target = $region41
    $region40: #{tpu_custom_call.1} parent=1 // pred_region
      _
    $region41: #{tpu_custom_call.1} parent=1 // pred_fallthru
      _
    // Predicated region
    $region42: #{tpu_custom_call.1} parent=1 // pred_check
      _
    $region43: #{tpu_custom_call.1} parent=1 // pred_check_branch
      %39 = sbr.rel (0) target = $region45
    $region44: #{tpu_custom_call.1} parent=1 // pred_region
      _
    $region45: #{tpu_custom_call.1} parent=1 // pred_fallthru
      _
    %v41 = vld [vmem:[%s1] sm:$0xf]
    %v42 = vld [vmem:[%s1 + $0x4] sm:$0xf]
    %v43 = vld [vmem:[%s1 + $0x8] sm:$0xf]
    %v44 = vld [vmem:[%s1 + $0xc] sm:$0xf]
    %v45 = vld [vmem:[%s1 + $0x10] sm:$0xf]
    %v46 = vld [vmem:[%s1 + $0x14] sm:$0xf]
    %v47 = vld [vmem:[%s1 + $0x18] sm:$0xf]
    %v48 = vld [vmem:[%s1 + $0x1c] sm:$0xf]
    %v49 = vld [vmem:[%s1 + $0x20] sm:$0xf]
    %v50 = vld [vmem:[%s1 + $0x24] sm:$0xf]
    %v51 = vld [vmem:[%s1 + $0x28] sm:$0xf]
    %v52 = vld [vmem:[%s1 + $0x2c] sm:$0xf]
    %v53 = vld [vmem:[%s1 + $0x30] sm:$0xf]
    %v54 = vld [vmem:[%s1 + $0x34] sm:$0xf]
    %v55 = vld [vmem:[%s1 + $0x38] sm:$0xf]
    %v56 = vld [vmem:[%s1 + $0x3c] sm:$0xf]
    %v57 = vld [vmem:[%s1 + $0x40] sm:$0xf]
    %v58 = vld [vmem:[%s1 + $0x44] sm:$0xf]
    %v59 = vld [vmem:[%s1 + $0x48] sm:$0xf]
    %v60 = vld [vmem:[%s1 + $0x4c] sm:$0xf]
    %v61 = vld [vmem:[%s1 + $0x50] sm:$0xf]
    %v62 = vld [vmem:[%s1 + $0x54] sm:$0xf]
    %v63 = vld [vmem:[%s1 + $0x58] sm:$0xf]
    %v64 = vld [vmem:[%s1 + $0x5c] sm:$0xf]
    %v65 = vld [vmem:[%s1 + $0x60] sm:$0xf]
    %v66 = vld [vmem:[%s1 + $0x64] sm:$0xf]
    %v67 = vld [vmem:[%s1 + $0x68] sm:$0xf]
    %v68 = vld [vmem:[%s1 + $0x6c] sm:$0xf]
    %v69 = vld [vmem:[%s1 + $0x70] sm:$0xf]
    %v70 = vld [vmem:[%s1 + $0x74] sm:$0xf]
    %v71 = vld [vmem:[%s1 + $0x78] sm:$0xf]
    %v72 = vld [vmem:[%s1 + $0x7c] sm:$0xf]
    %v73 = vld [vmem:[%s0] sm:$0x7f]
    %v74 = vpack.c.bf16 %v73, %v73
    %v75 = vld [vmem:[%s2] sm:$0xff]
    %v76 = vld [vmem:[%s2 + $0x8] sm:$0xff]
    %v77 = vld [vmem:[%s2 + $0x10] sm:$0xff]
    %v78 = vld [vmem:[%s2 + $0x18] sm:$0xff]
    %v79 = vld [vmem:[%s2 + $0x20] sm:$0xff]
    %v80 = vld [vmem:[%s2 + $0x28] sm:$0xff]
    %v81 = vld [vmem:[%s2 + $0x30] sm:$0xff]
    %v82 = vld [vmem:[%s2 + $0x38] sm:$0xff]
    %v83 = vld [vmem:[%s2 + $0x40] sm:$0xff]
    %v84 = vld [vmem:[%s2 + $0x48] sm:$0xff]
    %v85 = vld [vmem:[%s2 + $0x50] sm:$0xff]
    %v86 = vld [vmem:[%s2 + $0x58] sm:$0xff]
    %v87 = vld [vmem:[%s2 + $0x60] sm:$0xff]
    %v88 = vld [vmem:[%s2 + $0x68] sm:$0xff]
    %v89 = vld [vmem:[%s2 + $0x70] sm:$0xff]
    %v90 = vld [vmem:[%s2 + $0x78] sm:$0xff]
    %v91 = vld [vmem:[%s2 + $0x80] sm:$0xff]
    %v92 = vld [vmem:[%s2 + $0x88] sm:$0xff]
    %v93 = vld [vmem:[%s2 + $0x90] sm:$0xff]
    %v94 = vld [vmem:[%s2 + $0x98] sm:$0xff]
    %v95 = vld [vmem:[%s2 + $0xa0] sm:$0xff]
    %v96 = vld [vmem:[%s2 + $0xa8] sm:$0xff]
    %v97 = vld [vmem:[%s2 + $0xb0] sm:$0xff]
    %v98 = vld [vmem:[%s2 + $0xb8] sm:$0xff]
    %v99 = vld [vmem:[%s2 + $0xc0] sm:$0xff]
    %v100 = vld [vmem:[%s2 + $0xc8] sm:$0xff]
    %v101 = vld [vmem:[%s2 + $0xd0] sm:$0xff]
    %v102 = vld [vmem:[%s2 + $0xd8] sm:$0xff]
    %v103 = vld [vmem:[%s2 + $0xe0] sm:$0xff]
    %v104 = vld [vmem:[%s2 + $0xe8] sm:$0xff]
    %v105 = vld [vmem:[%s2 + $0xf0] sm:$0xff]
    %v106 = vld [vmem:[%s2 + $0xf8] sm:$0xff]
    %108 = vset.pattern.permute.xlu0 0
    %109 = vperm.xlu0 %108, %v75
    %v110 = vpop.permute.xlu0 %109
    %113 = vset.pattern.permute.xlu0 0
    %114 = vperm.xlu0 %113, %v76
    %v115 = vpop.permute.xlu0 %114
    %118 = vset.pattern.permute.xlu0 0
    %119 = vperm.xlu0 %118, %v77
    %v120 = vpop.permute.xlu0 %119
    %123 = vset.pattern.permute.xlu0 0
    %124 = vperm.xlu0 %123, %v78
    %v125 = vpop.permute.xlu0 %124
    %128 = vset.pattern.permute.xlu0 0
    %129 = vperm.xlu0 %128, %v79
    %v130 = vpop.permute.xlu0 %129
    %133 = vset.pattern.permute.xlu0 0
    %134 = vperm.xlu0 %133, %v80
    %v135 = vpop.permute.xlu0 %134
    %138 = vset.pattern.permute.xlu0 0
    %139 = vperm.xlu0 %138, %v81
    %v140 = vpop.permute.xlu0 %139
    %143 = vset.pattern.permute.xlu0 0
    %144 = vperm.xlu0 %143, %v82
    %v145 = vpop.permute.xlu0 %144
    %148 = vset.pattern.permute.xlu0 0
    %149 = vperm.xlu0 %148, %v83
    %v150 = vpop.permute.xlu0 %149
    %153 = vset.pattern.permute.xlu0 0
    %154 = vperm.xlu0 %153, %v84
    %v155 = vpop.permute.xlu0 %154
    %158 = vset.pattern.permute.xlu0 0
    %159 = vperm.xlu0 %158, %v85
    %v160 = vpop.permute.xlu0 %159
    %163 = vset.pattern.permute.xlu0 0
    %164 = vperm.xlu0 %163, %v86
    %v165 = vpop.permute.xlu0 %164
    %168 = vset.pattern.permute.xlu0 0
    %169 = vperm.xlu0 %168, %v87
    %v170 = vpop.permute.xlu0 %169
    %173 = vset.pattern.permute.xlu0 0
    %174 = vperm.xlu0 %173, %v88
    %v175 = vpop.permute.xlu0 %174
    %178 = vset.pattern.permute.xlu0 0
    %179 = vperm.xlu0 %178, %v89
    %v180 = vpop.permute.xlu0 %179
    %183 = vset.pattern.permute.xlu0 0
    %184 = vperm.xlu0 %183, %v90
    %v185 = vpop.permute.xlu0 %184
    %188 = vset.pattern.permute.xlu0 0
    %189 = vperm.xlu0 %188, %v91
    %v190 = vpop.permute.xlu0 %189
    %193 = vset.pattern.permute.xlu0 0
    %194 = vperm.xlu0 %193, %v92
    %v195 = vpop.permute.xlu0 %194
    %198 = vset.pattern.permute.xlu0 0
    %199 = vperm.xlu0 %198, %v93
    %v200 = vpop.permute.xlu0 %199
    %203 = vset.pattern.permute.xlu0 0
    %204 = vperm.xlu0 %203, %v94
    %v205 = vpop.permute.xlu0 %204
    %208 = vset.pattern.permute.xlu0 0
    %209 = vperm.xlu0 %208, %v95
    %v210 = vpop.permute.xlu0 %209
    %213 = vset.pattern.permute.xlu0 0
    %214 = vperm.xlu0 %213, %v96
    %v215 = vpop.permute.xlu0 %214
    %218 = vset.pattern.permute.xlu0 0
    %219 = vperm.xlu0 %218, %v97
    %v220 = vpop.permute.xlu0 %219
    %223 = vset.pattern.permute.xlu0 0
    %224 = vperm.xlu0 %223, %v98
    %v225 = vpop.permute.xlu0 %224
    %228 = vset.pattern.permute.xlu0 0
    %229 = vperm.xlu0 %228, %v99
    %v230 = vpop.permute.xlu0 %229
    %233 = vset.pattern.permute.xlu0 0
    %234 = vperm.xlu0 %233, %v100
    %v235 = vpop.permute.xlu0 %234
    %238 = vset.pattern.permute.xlu0 0
    %239 = vperm.xlu0 %238, %v101
    %v240 = vpop.permute.xlu0 %239
    %243 = vset.pattern.permute.xlu0 0
    %244 = vperm.xlu0 %243, %v102
    %v245 = vpop.permute.xlu0 %244
    %248 = vset.pattern.permute.xlu0 0
    %249 = vperm.xlu0 %248, %v103
    %v250 = vpop.permute.xlu0 %249
    %253 = vset.pattern.permute.xlu0 0
    %254 = vperm.xlu0 %253, %v104
    %v255 = vpop.permute.xlu0 %254
    %258 = vset.pattern.permute.xlu0 0
    %259 = vperm.xlu0 %258, %v105
    %v260 = vpop.permute.xlu0 %259
    %263 = vset.pattern.permute.xlu0 0
    %264 = vperm.xlu0 %263, %v106
    %v265 = vpop.permute.xlu0 %264
    %v299 = vunpack.c.l.b16 %v41
    %v300 = vunpack.c.l.b16 %v42
    %v301 = vunpack.c.l.b16 %v43
    %v302 = vunpack.c.l.b16 %v44
    %v303 = vunpack.c.l.b16 %v45
    %v304 = vunpack.c.l.b16 %v46
    %v305 = vunpack.c.l.b16 %v47
    %v306 = vunpack.c.l.b16 %v48
    %v307 = vunpack.c.l.b16 %v49
    %v308 = vunpack.c.l.b16 %v50
    %v309 = vunpack.c.l.b16 %v51
    %v310 = vunpack.c.l.b16 %v52
    %v311 = vunpack.c.l.b16 %v53
    %v312 = vunpack.c.l.b16 %v54
    %v313 = vunpack.c.l.b16 %v55
    %v314 = vunpack.c.l.b16 %v56
    %v315 = vunpack.c.l.b16 %v57
    %v316 = vunpack.c.l.b16 %v58
    %v317 = vunpack.c.l.b16 %v59
    %v318 = vunpack.c.l.b16 %v60
    %v319 = vunpack.c.l.b16 %v61
    %v320 = vunpack.c.l.b16 %v62
    %v321 = vunpack.c.l.b16 %v63
    %v322 = vunpack.c.l.b16 %v64
    %v323 = vunpack.c.l.b16 %v65
    %v324 = vunpack.c.l.b16 %v66
    %v325 = vunpack.c.l.b16 %v67
    %v326 = vunpack.c.l.b16 %v68
    %v327 = vunpack.c.l.b16 %v69
    %v328 = vunpack.c.l.b16 %v70
    %v329 = vunpack.c.l.b16 %v71
    %v330 = vunpack.c.l.b16 %v72
    %v331 = vpack.c.b16 %v300, %v299
    %v332 = vpack.c.b16 %v302, %v301
    %v333 = vpack.c.b16 %v304, %v303
    %v334 = vpack.c.b16 %v306, %v305
    %v335 = vpack.c.b16 %v308, %v307
    %v336 = vpack.c.b16 %v310, %v309
    %v337 = vpack.c.b16 %v312, %v311
    %v338 = vpack.c.b16 %v314, %v313
    %v339 = vpack.c.b16 %v316, %v315
    %v340 = vpack.c.b16 %v318, %v317
    %v341 = vpack.c.b16 %v320, %v319
    %v342 = vpack.c.b16 %v322, %v321
    %v343 = vpack.c.b16 %v324, %v323
    %v344 = vpack.c.b16 %v326, %v325
    %v345 = vpack.c.b16 %v328, %v327
    %v346 = vpack.c.b16 %v330, %v329
    %vm347 = vcmask 56320
    %v349 = vsel %vm347, %v331, 0
    %v352 = vsel %vm347, %v332, 0
    %v355 = vsel %vm347, %v333, 0
    %v358 = vsel %vm347, %v334, 0
    %v361 = vsel %vm347, %v335, 0
    %v364 = vsel %vm347, %v336, 0
    %v367 = vsel %vm347, %v337, 0
    %v370 = vsel %vm347, %v338, 0
    %v373 = vsel %vm347, %v339, 0
    %v376 = vsel %vm347, %v340, 0
    %v379 = vsel %vm347, %v341, 0
    %v382 = vsel %vm347, %v342, 0
    %v385 = vsel %vm347, %v343, 0
    %v388 = vsel %vm347, %v344, 0
    %v391 = vsel %vm347, %v345, 0
    %v394 = vsel %vm347, %v346, 0
    %vm396 = vcmask 1042432
    %vm397 = vcmask 1043456
    %v398 = vsel %vm396, 4294967295, 65535
    %v399 = vsel %vm397, %v398, 0
    %v401 = vand.u32 %v74, %v399
    %403 = vmatprep.subr.bf16.mxu0 0
    %404 = vmatpush1.bf16.msra.mxu0 %v401
    %405 = vmatprep.subr.bf16.mxu0 0
    %406 = vmatpush1.bf16.msra.mxu0 0
    %407 = vmatprep.subr.bf16.mxu0 0
    %408 = vmatpush1.bf16.msra.mxu0 0
    %409 = vmatprep.subr.bf16.mxu0 0
    %410 = vmatpush1.bf16.msra.mxu0 0
    %411 = vmatprep.subr.bf16.mxu0 0
    %412 = vmatpush1.bf16.msra.mxu0 0
    %413 = vmatprep.subr.bf16.mxu0 0
    %414 = vmatpush1.bf16.msra.mxu0 0
    %415 = vmatprep.subr.bf16.mxu0 0
    %416 = vmatpush1.bf16.msra.mxu0 0
    %417 = vmatprep.subr.bf16.mxu0 0
    %418 = vmatpush1.bf16.msra.mxu0 0
    %419 = vmatprep.subr.bf16.mxu0 0
    %420 = vmatpush1.bf16.msra.mxu0 0
    %421 = vmatprep.subr.bf16.mxu0 0
    %422 = vmatpush1.bf16.msra.mxu0 0
    %423 = vmatprep.subr.bf16.mxu0 0
    %424 = vmatpush1.bf16.msra.mxu0 0
    %425 = vmatprep.subr.bf16.mxu0 0
    %426 = vmatpush1.bf16.msra.mxu0 0
    %427 = vmatprep.subr.bf16.mxu0 0
    %428 = vmatpush1.bf16.msra.mxu0 0
    %429 = vmatprep.subr.bf16.mxu0 0
    %430 = vmatpush1.bf16.msra.mxu0 0
    %431 = vmatprep.subr.bf16.mxu0 0
    %432 = vmatpush1.bf16.msra.mxu0 0
    %433 = vmatprep.subr.bf16.mxu0 0
    %434 = vmatpush1.bf16.msra.mxu0 0
    %435 = vmatprep.mubr.bf16.mxu0 0
    %436 = vmatmul.mubr.bf16.gmra.mrb[0].mxu0 %v349
    %v437 = vpop.f32.mrb[0].mxu0
    %v438 = vadd.f32 %v110, %v437
    %v439 = vpop.f32.mrb[0].mxu0
    %v440 = vpop.f32.mrb[0].mxu0
    %v441 = vadd.f32 %v115, %v440
    %v442 = vpop.f32.mrb[0].mxu0
    %443 = vmatprep.mubr.bf16.mxu0 0
    %444 = vmatmul.mubr.bf16.gmra.mrb[0].mxu0 %v352
    %v445 = vpop.f32.mrb[0].mxu0
    %v446 = vadd.f32 %v120, %v445
    %v447 = vpop.f32.mrb[0].mxu0
    %v448 = vpop.f32.mrb[0].mxu0
    %v449 = vadd.f32 %v125, %v448
    %v450 = vpop.f32.mrb[0].mxu0
    %451 = vmatprep.mubr.bf16.mxu0 0
    %452 = vmatmul.mubr.bf16.gmra.mrb[0].mxu0 %v355
    %v453 = vpop.f32.mrb[0].mxu0
    %v454 = vadd.f32 %v130, %v453
    %v455 = vpop.f32.mrb[0].mxu0
    %v456 = vpop.f32.mrb[0].mxu0
    %v457 = vadd.f32 %v135, %v456
    %v458 = vpop.f32.mrb[0].mxu0
    %459 = vmatprep.mubr.bf16.mxu0 0
    %460 = vmatmul.mubr.bf16.gmra.mrb[0].mxu0 %v358
    %v461 = vpop.f32.mrb[0].mxu0
    %v462 = vadd.f32 %v140, %v461
    %v463 = vpop.f32.mrb[0].mxu0
    %v464 = vpop.f32.mrb[0].mxu0
    %v465 = vadd.f32 %v145, %v464
    %v466 = vpop.f32.mrb[0].mxu0
    %467 = vmatprep.mubr.bf16.mxu0 0
    %468 = vmatmul.mubr.bf16.gmra.mrb[0].mxu0 %v361
    %v469 = vpop.f32.mrb[0].mxu0
    %v470 = vadd.f32 %v150, %v469
    %v471 = vpop.f32.mrb[0].mxu0
    %v472 = vpop.f32.mrb[0].mxu0
    %v473 = vadd.f32 %v155, %v472
    %v474 = vpop.f32.mrb[0].mxu0
    %475 = vmatprep.mubr.bf16.mxu0 0
    %476 = vmatmul.mubr.bf16.gmra.mrb[0].mxu0 %v364
    %v477 = vpop.f32.mrb[0].mxu0
    %v478 = vadd.f32 %v160, %v477
    %v479 = vpop.f32.mrb[0].mxu0
    %v480 = vpop.f32.mrb[0].mxu0
    %v481 = vadd.f32 %v165, %v480
    %v482 = vpop.f32.mrb[0].mxu0
    %483 = vmatprep.mubr.bf16.mxu0 0
    %484 = vmatmul.mubr.bf16.gmra.mrb[0].mxu0 %v367
    %v485 = vpop.f32.mrb[0].mxu0
    %v486 = vadd.f32 %v170, %v485
    %v487 = vpop.f32.mrb[0].mxu0
    %v488 = vpop.f32.mrb[0].mxu0
    %v489 = vadd.f32 %v175, %v488
    %v490 = vpop.f32.mrb[0].mxu0
    %491 = vmatprep.mubr.bf16.mxu0 0
    %492 = vmatmul.mubr.bf16.gmra.mrb[0].mxu0 %v370
    %v493 = vpop.f32.mrb[0].mxu0
    %v494 = vadd.f32 %v180, %v493
    %v495 = vpop.f32.mrb[0].mxu0
    %v496 = vpop.f32.mrb[0].mxu0
    %v497 = vadd.f32 %v185, %v496
    %v498 = vpop.f32.mrb[0].mxu0
    %499 = vmatprep.mubr.bf16.mxu0 0
    %500 = vmatmul.mubr.bf16.gmra.mrb[0].mxu0 %v373
    %v501 = vpop.f32.mrb[0].mxu0
    %v502 = vadd.f32 %v190, %v501
    %v503 = vpop.f32.mrb[0].mxu0
    %v504 = vpop.f32.mrb[0].mxu0
    %v505 = vadd.f32 %v195, %v504
    %v506 = vpop.f32.mrb[0].mxu0
    %507 = vmatprep.mubr.bf16.mxu0 0
    %508 = vmatmul.mubr.bf16.gmra.mrb[0].mxu0 %v376
    %v509 = vpop.f32.mrb[0].mxu0
    %v510 = vadd.f32 %v200, %v509
    %v511 = vpop.f32.mrb[0].mxu0
    %v512 = vpop.f32.mrb[0].mxu0
    %v513 = vadd.f32 %v205, %v512
    %v514 = vpop.f32.mrb[0].mxu0
    %515 = vmatprep.mubr.bf16.mxu0 0
    %516 = vmatmul.mubr.bf16.gmra.mrb[0].mxu0 %v379
    %v517 = vpop.f32.mrb[0].mxu0
    %v518 = vadd.f32 %v210, %v517
    %v519 = vpop.f32.mrb[0].mxu0
    %v520 = vpop.f32.mrb[0].mxu0
    %v521 = vadd.f32 %v215, %v520
    %v522 = vpop.f32.mrb[0].mxu0
    %523 = vmatprep.mubr.bf16.mxu0 0
    %524 = vmatmul.mubr.bf16.gmra.mrb[0].mxu0 %v382
    %v525 = vpop.f32.mrb[0].mxu0
    %v526 = vadd.f32 %v220, %v525
    %v527 = vpop.f32.mrb[0].mxu0
    %v528 = vpop.f32.mrb[0].mxu0
    %v529 = vadd.f32 %v225, %v528
    %v530 = vpop.f32.mrb[0].mxu0
    %531 = vmatprep.mubr.bf16.mxu0 0
    %532 = vmatmul.mubr.bf16.gmra.mrb[0].mxu0 %v385
    %v533 = vpop.f32.mrb[0].mxu0
    %v534 = vadd.f32 %v230, %v533
    %v535 = vpop.f32.mrb[0].mxu0
    %v536 = vpop.f32.mrb[0].mxu0
    %v537 = vadd.f32 %v235, %v536
    %v538 = vpop.f32.mrb[0].mxu0
    %539 = vmatprep.mubr.bf16.mxu0 0
    %540 = vmatmul.mubr.bf16.gmra.mrb[0].mxu0 %v388
    %v541 = vpop.f32.mrb[0].mxu0
    %v542 = vadd.f32 %v240, %v541
    %v543 = vpop.f32.mrb[0].mxu0
    %v544 = vpop.f32.mrb[0].mxu0
    %v545 = vadd.f32 %v245, %v544
    %v546 = vpop.f32.mrb[0].mxu0
    %547 = vmatprep.mubr.bf16.mxu0 0
    %548 = vmatmul.mubr.bf16.gmra.mrb[0].mxu0 %v391
    %v549 = vpop.f32.mrb[0].mxu0
    %v550 = vadd.f32 %v250, %v549
    %v551 = vpop.f32.mrb[0].mxu0
    %v552 = vpop.f32.mrb[0].mxu0
    %v553 = vadd.f32 %v255, %v552
    %v554 = vpop.f32.mrb[0].mxu0
    %555 = vmatprep.mubr.bf16.mxu0 0
    %556 = vmatmul.mubr.bf16.gmra.mrb[0].mxu0 %v394
    %v557 = vpop.f32.mrb[0].mxu0
    %v558 = vadd.f32 %v260, %v557
    %v559 = vpop.f32.mrb[0].mxu0
    %v560 = vpop.f32.mrb[0].mxu0
    %v561 = vadd.f32 %v265, %v560
    %v562 = vpop.f32.mrb[0].mxu0
    %563 = vdwg.mxu0
    %v564 = vmax.f32 %v438, 0.0
    %v565 = vmax.f32 %v441, 0.0
    %v566 = vmax.f32 %v446, 0.0
    %v567 = vmax.f32 %v449, 0.0
    %v568 = vmax.f32 %v454, 0.0
    %v569 = vmax.f32 %v457, 0.0
    %v570 = vmax.f32 %v462, 0.0
    %v571 = vmax.f32 %v465, 0.0
    %v572 = vmax.f32 %v470, 0.0
    %v573 = vmax.f32 %v473, 0.0
    %v574 = vmax.f32 %v478, 0.0
    %v575 = vmax.f32 %v481, 0.0
    %v576 = vmax.f32 %v486, 0.0
    %v577 = vmax.f32 %v489, 0.0
    %v578 = vmax.f32 %v494, 0.0
    %v579 = vmax.f32 %v497, 0.0
    %v580 = vmax.f32 %v502, 0.0
    %v581 = vmax.f32 %v505, 0.0
    %v582 = vmax.f32 %v510, 0.0
    %v583 = vmax.f32 %v513, 0.0
    %v584 = vmax.f32 %v518, 0.0
    %v585 = vmax.f32 %v521, 0.0
    %v586 = vmax.f32 %v526, 0.0
    %v587 = vmax.f32 %v529, 0.0
    %v588 = vmax.f32 %v534, 0.0
    %v589 = vmax.f32 %v537, 0.0
    %v590 = vmax.f32 %v542, 0.0
    %v591 = vmax.f32 %v545, 0.0
    %v592 = vmax.f32 %v550, 0.0
    %v593 = vmax.f32 %v553, 0.0
    %v594 = vmax.f32 %v558, 0.0
    %v595 = vmax.f32 %v561, 0.0
    %v596 = vld [vmem:[%s3] sm:$0xff]
    %v597 = vld [vmem:[%s3 + $0x8] sm:$0xff]
    %v598 = vld [vmem:[%s3 + $0x10] sm:$0xff]
    %v599 = vld [vmem:[%s3 + $0x18] sm:$0xff]
    %v600 = vld [vmem:[%s3 + $0x20] sm:$0xff]
    %v601 = vld [vmem:[%s3 + $0x28] sm:$0xff]
    %v602 = vld [vmem:[%s3 + $0x30] sm:$0xff]
    %v603 = vld [vmem:[%s3 + $0x38] sm:$0xff]
    %v604 = vld [vmem:[%s3 + $0x40] sm:$0xff]
    %v605 = vld [vmem:[%s3 + $0x48] sm:$0xff]
    %v606 = vld [vmem:[%s3 + $0x50] sm:$0xff]
    %v607 = vld [vmem:[%s3 + $0x58] sm:$0xff]
    %v608 = vld [vmem:[%s3 + $0x60] sm:$0xff]
    %v609 = vld [vmem:[%s3 + $0x68] sm:$0xff]
    %v610 = vld [vmem:[%s3 + $0x70] sm:$0xff]
    %v611 = vld [vmem:[%s3 + $0x78] sm:$0xff]
    %v612 = vpack.c.bf16 %v565, %v564
    %v613 = vpack.c.bf16 %v567, %v566
    %v614 = vpack.c.bf16 %v569, %v568
    %v615 = vpack.c.bf16 %v571, %v570
    %v616 = vpack.c.bf16 %v573, %v572
    %v617 = vpack.c.bf16 %v575, %v574
    %v618 = vpack.c.bf16 %v577, %v576
    %v619 = vpack.c.bf16 %v579, %v578
    %v620 = vpack.c.bf16 %v581, %v580
    %v621 = vpack.c.bf16 %v583, %v582
    %v622 = vpack.c.bf16 %v585, %v584
    %v623 = vpack.c.bf16 %v587, %v586
    %v624 = vpack.c.bf16 %v589, %v588
    %v625 = vpack.c.bf16 %v591, %v590
    %v626 = vpack.c.bf16 %v593, %v592
    %v627 = vpack.c.bf16 %v595, %v594
    %v628 = vld [vmem:[%s4] sm:$0xff]
    %v629 = vld [vmem:[%s4 + $0x8] sm:$0xff]
    %v630 = vld [vmem:[%s4 + $0x10] sm:$0xff]
    %v631 = vld [vmem:[%s4 + $0x18] sm:$0xff]
    %v632 = vld [vmem:[%s4 + $0x20] sm:$0xff]
    %v633 = vld [vmem:[%s4 + $0x28] sm:$0xff]
    %v634 = vld [vmem:[%s4 + $0x30] sm:$0xff]
    %v635 = vld [vmem:[%s4 + $0x38] sm:$0xff]
    %v636 = vld [vmem:[%s4 + $0x40] sm:$0xff]
    %v637 = vld [vmem:[%s4 + $0x48] sm:$0xff]
    %v638 = vld [vmem:[%s4 + $0x50] sm:$0xff]
    %v639 = vld [vmem:[%s4 + $0x58] sm:$0xff]
    %v640 = vld [vmem:[%s4 + $0x60] sm:$0xff]
    %v641 = vld [vmem:[%s4 + $0x68] sm:$0xff]
    %v642 = vld [vmem:[%s4 + $0x70] sm:$0xff]
    %v643 = vld [vmem:[%s4 + $0x78] sm:$0xff]
    %645 = vset.pattern.permute.xlu0 0
    %646 = vperm.xlu0 %645, %v628
    %v647 = vpop.permute.xlu0 %646
    %650 = vset.pattern.permute.xlu0 0
    %651 = vperm.xlu0 %650, %v629
    %v652 = vpop.permute.xlu0 %651
    %655 = vset.pattern.permute.xlu0 0
    %656 = vperm.xlu0 %655, %v630
    %v657 = vpop.permute.xlu0 %656
    %660 = vset.pattern.permute.xlu0 0
    %661 = vperm.xlu0 %660, %v631
    %v662 = vpop.permute.xlu0 %661
    %665 = vset.pattern.permute.xlu0 0
    %666 = vperm.xlu0 %665, %v632
    %v667 = vpop.permute.xlu0 %666
    %670 = vset.pattern.permute.xlu0 0
    %671 = vperm.xlu0 %670, %v633
    %v672 = vpop.permute.xlu0 %671
    %675 = vset.pattern.permute.xlu0 0
    %676 = vperm.xlu0 %675, %v634
    %v677 = vpop.permute.xlu0 %676
    %680 = vset.pattern.permute.xlu0 0
    %681 = vperm.xlu0 %680, %v635
    %v682 = vpop.permute.xlu0 %681
    %685 = vset.pattern.permute.xlu0 0
    %686 = vperm.xlu0 %685, %v636
    %v687 = vpop.permute.xlu0 %686
    %690 = vset.pattern.permute.xlu0 0
    %691 = vperm.xlu0 %690, %v637
    %v692 = vpop.permute.xlu0 %691
    %695 = vset.pattern.permute.xlu0 0
    %696 = vperm.xlu0 %695, %v638
    %v697 = vpop.permute.xlu0 %696
    %700 = vset.pattern.permute.xlu0 0
    %701 = vperm.xlu0 %700, %v639
    %v702 = vpop.permute.xlu0 %701
    %705 = vset.pattern.permute.xlu0 0
    %706 = vperm.xlu0 %705, %v640
    %v707 = vpop.permute.xlu0 %706
    %710 = vset.pattern.permute.xlu0 0
    %711 = vperm.xlu0 %710, %v641
    %v712 = vpop.permute.xlu0 %711
    %715 = vset.pattern.permute.xlu0 0
    %716 = vperm.xlu0 %715, %v642
    %v717 = vpop.permute.xlu0 %716
    %720 = vset.pattern.permute.xlu0 0
    %721 = vperm.xlu0 %720, %v643
    %v722 = vpop.permute.xlu0 %721
    %v740 = vunpack.c.l.b16 %v596
    %v741 = vunpack.c.h.b16 %v596
    %v742 = vunpack.c.l.b16 %v597
    %v743 = vunpack.c.h.b16 %v597
    %v744 = vunpack.c.l.b16 %v598
    %v745 = vunpack.c.h.b16 %v598
    %v746 = vunpack.c.l.b16 %v599
    %v747 = vunpack.c.h.b16 %v599
    %v748 = vunpack.c.l.b16 %v600
    %v749 = vunpack.c.h.b16 %v600
    %v750 = vunpack.c.l.b16 %v601
    %v751 = vunpack.c.h.b16 %v601
    %v752 = vunpack.c.l.b16 %v602
    %v753 = vunpack.c.h.b16 %v602
    %v754 = vunpack.c.l.b16 %v603
    %v755 = vunpack.c.h.b16 %v603
    %v756 = vunpack.c.l.b16 %v604
    %v757 = vunpack.c.h.b16 %v604
    %v758 = vunpack.c.l.b16 %v605
    %v759 = vunpack.c.h.b16 %v605
    %v760 = vunpack.c.l.b16 %v606
    %v761 = vunpack.c.h.b16 %v606
    %v762 = vunpack.c.l.b16 %v607
    %v763 = vunpack.c.h.b16 %v607
    %v764 = vunpack.c.l.b16 %v608
    %v765 = vunpack.c.h.b16 %v608
    %v766 = vunpack.c.l.b16 %v609
    %v767 = vunpack.c.h.b16 %v609
    %v768 = vunpack.c.l.b16 %v610
    %v769 = vunpack.c.h.b16 %v610
    %v770 = vunpack.c.l.b16 %v611
    %v771 = vunpack.c.h.b16 %v611
    %v772 = vpack.c.b16 %v742, %v740
    %v773 = vpack.c.b16 %v743, %v741
    %v774 = vpack.c.b16 %v746, %v744
    %v775 = vpack.c.b16 %v747, %v745
    %v776 = vpack.c.b16 %v750, %v748
    %v777 = vpack.c.b16 %v751, %v749
    %v778 = vpack.c.b16 %v754, %v752
    %v779 = vpack.c.b16 %v755, %v753
    %v780 = vpack.c.b16 %v758, %v756
    %v781 = vpack.c.b16 %v759, %v757
    %v782 = vpack.c.b16 %v762, %v760
    %v783 = vpack.c.b16 %v763, %v761
    %v784 = vpack.c.b16 %v766, %v764
    %v785 = vpack.c.b16 %v767, %v765
    %v786 = vpack.c.b16 %v770, %v768
    %v787 = vpack.c.b16 %v771, %v769
    %804 = vmatprep.subr.bf16.mxu0 0
    %805 = vmatpush1.bf16.msra.mxu0 %v612
    %806 = vmatprep.subr.bf16.mxu0 0
    %807 = vmatpush1.bf16.msra.mxu0 %v613
    %808 = vmatprep.subr.bf16.mxu0 0
    %809 = vmatpush1.bf16.msra.mxu0 %v614
    %810 = vmatprep.subr.bf16.mxu0 0
    %811 = vmatpush1.bf16.msra.mxu0 %v615
    %812 = vmatprep.subr.bf16.mxu0 0
    %813 = vmatpush1.bf16.msra.mxu0 %v616
    %814 = vmatprep.subr.bf16.mxu0 0
    %815 = vmatpush1.bf16.msra.mxu0 %v617
    %816 = vmatprep.subr.bf16.mxu0 0
    %817 = vmatpush1.bf16.msra.mxu0 %v618
    %818 = vmatprep.subr.bf16.mxu0 0
    %819 = vmatpush1.bf16.msra.mxu0 %v619
    %820 = vmatprep.subr.bf16.mxu0 0
    %821 = vmatpush1.bf16.msra.mxu0 %v620
    %822 = vmatprep.subr.bf16.mxu0 0
    %823 = vmatpush1.bf16.msra.mxu0 %v621
    %824 = vmatprep.subr.bf16.mxu0 0
    %825 = vmatpush1.bf16.msra.mxu0 %v622
    %826 = vmatprep.subr.bf16.mxu0 0
    %827 = vmatpush1.bf16.msra.mxu0 %v623
    %828 = vmatprep.subr.bf16.mxu0 0
    %829 = vmatpush1.bf16.msra.mxu0 %v624
    %830 = vmatprep.subr.bf16.mxu0 0
    %831 = vmatpush1.bf16.msra.mxu0 %v625
    %832 = vmatprep.subr.bf16.mxu0 0
    %833 = vmatpush1.bf16.msra.mxu0 %v626
    %834 = vmatprep.subr.bf16.mxu0 0
    %835 = vmatpush1.bf16.msra.mxu0 %v627
    %836 = vmatprep.mubr.bf16.mxu0 %v773
    %837 = vmatmul.mubr.bf16.gmra.mrb[0].mxu0 %v772
    %v838 = vpop.f32.mrb[0].mxu0
    %v839 = vadd.f32 %v647, %v838
    %v840 = vpop.f32.mrb[0].mxu0
    %v841 = vpop.f32.mrb[0].mxu0
    %v842 = vadd.f32 %v652, %v841
    %v843 = vpop.f32.mrb[0].mxu0
    %844 = vmatprep.mubr.bf16.mxu0 %v775
    %845 = vmatmul.mubr.bf16.gmra.mrb[0].mxu0 %v774
    %v846 = vpop.f32.mrb[0].mxu0
    %v847 = vadd.f32 %v657, %v846
    %v848 = vpop.f32.mrb[0].mxu0
    %v849 = vpop.f32.mrb[0].mxu0
    %v850 = vadd.f32 %v662, %v849
    %v851 = vpop.f32.mrb[0].mxu0
    %852 = vmatprep.mubr.bf16.mxu0 %v777
    %853 = vmatmul.mubr.bf16.gmra.mrb[0].mxu0 %v776
    %v854 = vpop.f32.mrb[0].mxu0
    %v855 = vadd.f32 %v667, %v854
    %v856 = vpop.f32.mrb[0].mxu0
    %v857 = vpop.f32.mrb[0].mxu0
    %v858 = vadd.f32 %v672, %v857
    %v859 = vpop.f32.mrb[0].mxu0
    %860 = vmatprep.mubr.bf16.mxu0 %v779
    %861 = vmatmul.mubr.bf16.gmra.mrb[0].mxu0 %v778
    %v862 = vpop.f32.mrb[0].mxu0
    %v863 = vadd.f32 %v677, %v862
    %v864 = vpop.f32.mrb[0].mxu0
    %v865 = vpop.f32.mrb[0].mxu0
    %v866 = vadd.f32 %v682, %v865
    %v867 = vpop.f32.mrb[0].mxu0
    %868 = vmatprep.mubr.bf16.mxu0 %v781
    %869 = vmatmul.mubr.bf16.gmra.mrb[0].mxu0 %v780
    %v870 = vpop.f32.mrb[0].mxu0
    %v871 = vadd.f32 %v687, %v870
    %v872 = vpop.f32.mrb[0].mxu0
    %v873 = vpop.f32.mrb[0].mxu0
    %v874 = vadd.f32 %v692, %v873
    %v875 = vpop.f32.mrb[0].mxu0
    %876 = vmatprep.mubr.bf16.mxu0 %v783
    %877 = vmatmul.mubr.bf16.gmra.mrb[0].mxu0 %v782
    %v878 = vpop.f32.mrb[0].mxu0
    %v879 = vadd.f32 %v697, %v878
    %v880 = vpop.f32.mrb[0].mxu0
    %v881 = vpop.f32.mrb[0].mxu0
    %v882 = vadd.f32 %v702, %v881
    %v883 = vpop.f32.mrb[0].mxu0
    %884 = vmatprep.mubr.bf16.mxu0 %v785
    %885 = vmatmul.mubr.bf16.gmra.mrb[0].mxu0 %v784
    %v886 = vpop.f32.mrb[0].mxu0
    %v887 = vadd.f32 %v707, %v886
    %v888 = vpop.f32.mrb[0].mxu0
    %v889 = vpop.f32.mrb[0].mxu0
    %v890 = vadd.f32 %v712, %v889
    %v891 = vpop.f32.mrb[0].mxu0
    %892 = vmatprep.mubr.bf16.mxu0 %v787
    %893 = vmatmul.mubr.bf16.gmra.mrb[0].mxu0 %v786
    %v894 = vpop.f32.mrb[0].mxu0
    %v895 = vadd.f32 %v717, %v894
    %v896 = vpop.f32.mrb[0].mxu0
    %v897 = vpop.f32.mrb[0].mxu0
    %v898 = vadd.f32 %v722, %v897
    %v899 = vpop.f32.mrb[0].mxu0
    %900 = vdwg.mxu0
    %v901 = vmax.f32 %v839, 0.0
    %v902 = vmax.f32 %v842, 0.0
    %v903 = vmax.f32 %v847, 0.0
    %v904 = vmax.f32 %v850, 0.0
    %v905 = vmax.f32 %v855, 0.0
    %v906 = vmax.f32 %v858, 0.0
    %v907 = vmax.f32 %v863, 0.0
    %v908 = vmax.f32 %v866, 0.0
    %v909 = vmax.f32 %v871, 0.0
    %v910 = vmax.f32 %v874, 0.0
    %v911 = vmax.f32 %v879, 0.0
    %v912 = vmax.f32 %v882, 0.0
    %v913 = vmax.f32 %v887, 0.0
    %v914 = vmax.f32 %v890, 0.0
    %v915 = vmax.f32 %v895, 0.0
    %v916 = vmax.f32 %v898, 0.0
    %v917 = vld [vmem:[%s5] sm:$0xf]
    %v918 = vld [vmem:[%s5 + $0x4] sm:$0xf]
    %v919 = vld [vmem:[%s5 + $0x8] sm:$0xf]
    %v920 = vld [vmem:[%s5 + $0xc] sm:$0xf]
    %v921 = vld [vmem:[%s5 + $0x10] sm:$0xf]
    %v922 = vld [vmem:[%s5 + $0x14] sm:$0xf]
    %v923 = vld [vmem:[%s5 + $0x18] sm:$0xf]
    %v924 = vld [vmem:[%s5 + $0x1c] sm:$0xf]
    %v925 = vpack.c.bf16 %v902, %v901
    %v926 = vpack.c.bf16 %v904, %v903
    %v927 = vpack.c.bf16 %v906, %v905
    %v928 = vpack.c.bf16 %v908, %v907
    %v929 = vpack.c.bf16 %v910, %v909
    %v930 = vpack.c.bf16 %v912, %v911
    %v931 = vpack.c.bf16 %v914, %v913
    %v932 = vpack.c.bf16 %v916, %v915
    %v933 = vld [vmem:[%s6] sm:$0xff]
    %v934 = vld [vmem:[%s6 + $0x8] sm:$0xff]
    %v935 = vld [vmem:[%s6 + $0x10] sm:$0xff]
    %v936 = vld [vmem:[%s6 + $0x18] sm:$0xff]
    %v937 = vld [vmem:[%s6 + $0x20] sm:$0xff]
    %v938 = vld [vmem:[%s6 + $0x28] sm:$0xff]
    %v939 = vld [vmem:[%s6 + $0x30] sm:$0xff]
    %v940 = vld [vmem:[%s6 + $0x38] sm:$0xff]
    %942 = vset.pattern.permute.xlu0 0
    %943 = vperm.xlu0 %942, %v933
    %v944 = vpop.permute.xlu0 %943
    %947 = vset.pattern.permute.xlu0 0
    %948 = vperm.xlu0 %947, %v934
    %v949 = vpop.permute.xlu0 %948
    %952 = vset.pattern.permute.xlu0 0
    %953 = vperm.xlu0 %952, %v935
    %v954 = vpop.permute.xlu0 %953
    %957 = vset.pattern.permute.xlu0 0
    %958 = vperm.xlu0 %957, %v936
    %v959 = vpop.permute.xlu0 %958
    %962 = vset.pattern.permute.xlu0 0
    %963 = vperm.xlu0 %962, %v937
    %v964 = vpop.permute.xlu0 %963
    %967 = vset.pattern.permute.xlu0 0
    %968 = vperm.xlu0 %967, %v938
    %v969 = vpop.permute.xlu0 %968
    %972 = vset.pattern.permute.xlu0 0
    %973 = vperm.xlu0 %972, %v939
    %v974 = vpop.permute.xlu0 %973
    %977 = vset.pattern.permute.xlu0 0
    %978 = vperm.xlu0 %977, %v940
    %v979 = vpop.permute.xlu0 %978
    %v989 = vunpack.c.l.b16 %v917
    %v990 = vunpack.c.l.b16 %v918
    %v991 = vunpack.c.l.b16 %v919
    %v992 = vunpack.c.l.b16 %v920
    %v993 = vunpack.c.l.b16 %v921
    %v994 = vunpack.c.l.b16 %v922
    %v995 = vunpack.c.l.b16 %v923
    %v996 = vunpack.c.l.b16 %v924
    %v997 = vpack.c.b16 %v990, %v989
    %v998 = vpack.c.b16 %v992, %v991
    %v999 = vpack.c.b16 %v994, %v993
    %v1000 = vpack.c.b16 %v996, %v995
    %1005 = vmatprep.subr.bf16.mxu0 0
    %1006 = vmatpush1.bf16.msra.mxu0 %v925
    %1007 = vmatprep.subr.bf16.mxu0 0
    %1008 = vmatpush1.bf16.msra.mxu0 %v926
    %1009 = vmatprep.subr.bf16.mxu0 0
    %1010 = vmatpush1.bf16.msra.mxu0 %v927
    %1011 = vmatprep.subr.bf16.mxu0 0
    %1012 = vmatpush1.bf16.msra.mxu0 %v928
    %1013 = vmatprep.subr.bf16.mxu0 0
    %1014 = vmatpush1.bf16.msra.mxu0 %v929
    %1015 = vmatprep.subr.bf16.mxu0 0
    %1016 = vmatpush1.bf16.msra.mxu0 %v930
    %1017 = vmatprep.subr.bf16.mxu0 0
    %1018 = vmatpush1.bf16.msra.mxu0 %v931
    %1019 = vmatprep.subr.bf16.mxu0 0
    %1020 = vmatpush1.bf16.msra.mxu0 %v932
    %1021 = vmatprep.subr.bf16.mxu0 0
    %1022 = vmatpush1.bf16.msra.mxu0 0
    %1023 = vmatprep.subr.bf16.mxu0 0
    %1024 = vmatpush1.bf16.msra.mxu0 0
    %1025 = vmatprep.subr.bf16.mxu0 0
    %1026 = vmatpush1.bf16.msra.mxu0 0
    %1027 = vmatprep.subr.bf16.mxu0 0
    %1028 = vmatpush1.bf16.msra.mxu0 0
    %1029 = vmatprep.subr.bf16.mxu0 0
    %1030 = vmatpush1.bf16.msra.mxu0 0
    %1031 = vmatprep.subr.bf16.mxu0 0
    %1032 = vmatpush1.bf16.msra.mxu0 0
    %1033 = vmatprep.subr.bf16.mxu0 0
    %1034 = vmatpush1.bf16.msra.mxu0 0
    %1035 = vmatprep.subr.bf16.mxu0 0
    %1036 = vmatpush1.bf16.msra.mxu0 0
    %1037 = vmatprep.mubr.bf16.mxu0 0
    %1038 = vmatmul.mubr.bf16.gmra.mrb[0].mxu0 %v997
    %v1039 = vpop.f32.mrb[0].mxu0
    %v1040 = vadd.f32 %v944, %v1039
    %v1041 = vpop.f32.mrb[0].mxu0
    %v1042 = vpop.f32.mrb[0].mxu0
    %v1043 = vadd.f32 %v949, %v1042
    %v1044 = vpop.f32.mrb[0].mxu0
    %1045 = vmatprep.mubr.bf16.mxu0 0
    %1046 = vmatmul.mubr.bf16.gmra.mrb[0].mxu0 %v998
    %v1047 = vpop.f32.mrb[0].mxu0
    %v1048 = vadd.f32 %v954, %v1047
    %v1049 = vpop.f32.mrb[0].mxu0
    %v1050 = vpop.f32.mrb[0].mxu0
    %v1051 = vadd.f32 %v959, %v1050
    %v1052 = vpop.f32.mrb[0].mxu0
    %1053 = vmatprep.mubr.bf16.mxu0 0
    %1054 = vmatmul.mubr.bf16.gmra.mrb[0].mxu0 %v999
    %v1055 = vpop.f32.mrb[0].mxu0
    %v1056 = vadd.f32 %v964, %v1055
    %v1057 = vpop.f32.mrb[0].mxu0
    %v1058 = vpop.f32.mrb[0].mxu0
    %v1059 = vadd.f32 %v969, %v1058
    %v1060 = vpop.f32.mrb[0].mxu0
    %1061 = vmatprep.mubr.bf16.mxu0 0
    %1062 = vmatmul.mubr.bf16.gmra.mrb[0].mxu0 %v1000
    %v1063 = vpop.f32.mrb[0].mxu0
    %v1064 = vadd.f32 %v974, %v1063
    %v1065 = vpop.f32.mrb[0].mxu0
    %v1066 = vpop.f32.mrb[0].mxu0
    %v1067 = vadd.f32 %v979, %v1066
    %v1068 = vpop.f32.mrb[0].mxu0
    %1069 = vdwg.mxu0
    %v1070 = vmax.f32 %v1040, 0.0
    %v1071 = vmax.f32 %v1043, 0.0
    %v1072 = vmax.f32 %v1048, 0.0
    %v1073 = vmax.f32 %v1051, 0.0
    %v1074 = vmax.f32 %v1056, 0.0
    %v1075 = vmax.f32 %v1059, 0.0
    %v1076 = vmax.f32 %v1064, 0.0
    %v1077 = vmax.f32 %v1067, 0.0
    %v1078 = vld [vmem:[%s7] sm:$0xf]
    %v1079 = vld [vmem:[%s7 + $0x4] sm:$0xf]
    %v1080 = vld [vmem:[%s7 + $0x8] sm:$0xf]
    %v1081 = vld [vmem:[%s7 + $0xc] sm:$0xf]
    %v1082 = vpack.c.bf16 %v1071, %v1070
    %v1083 = vpack.c.bf16 %v1073, %v1072
    %v1084 = vpack.c.bf16 %v1075, %v1074
    %v1085 = vpack.c.bf16 %v1077, %v1076
    %v1086 = vld [vmem:[%s8] sm:$0xff]
    %v1087 = vld [vmem:[%s8 + $0x8] sm:$0xff]
    %v1088 = vld [vmem:[%s8 + $0x10] sm:$0xff]
    %v1089 = vld [vmem:[%s8 + $0x18] sm:$0xff]
    %1091 = vset.pattern.permute.xlu0 0
    %1092 = vperm.xlu0 %1091, %v1086
    %v1093 = vpop.permute.xlu0 %1092
    %1096 = vset.pattern.permute.xlu0 0
    %1097 = vperm.xlu0 %1096, %v1087
    %v1098 = vpop.permute.xlu0 %1097
    %1101 = vset.pattern.permute.xlu0 0
    %1102 = vperm.xlu0 %1101, %v1088
    %v1103 = vpop.permute.xlu0 %1102
    %1106 = vset.pattern.permute.xlu0 0
    %1107 = vperm.xlu0 %1106, %v1089
    %v1108 = vpop.permute.xlu0 %1107
    %v1114 = vunpack.c.l.b16 %v1078
    %v1115 = vunpack.c.l.b16 %v1079
    %v1116 = vunpack.c.l.b16 %v1080
    %v1117 = vunpack.c.l.b16 %v1081
    %v1118 = vpack.c.b16 %v1115, %v1114
    %v1119 = vpack.c.b16 %v1117, %v1116
    %vm1120 = vcmask 523264
    %v1122 = vsel %vm1120, %v1118, 0
    %v1125 = vsel %vm1120, %v1119, 0
    %1127 = vmatprep.subr.bf16.mxu0 0
    %1128 = vmatpush1.bf16.msra.mxu0 %v1082
    %1129 = vmatprep.subr.bf16.mxu0 0
    %1130 = vmatpush1.bf16.msra.mxu0 %v1083
    %1131 = vmatprep.subr.bf16.mxu0 0
    %1132 = vmatpush1.bf16.msra.mxu0 %v1084
    %1133 = vmatprep.subr.bf16.mxu0 0
    %1134 = vmatpush1.bf16.msra.mxu0 %v1085
    %1135 = vmatprep.subr.bf16.mxu0 0
    %1136 = vmatpush1.bf16.msra.mxu0 0
    %1137 = vmatprep.subr.bf16.mxu0 0
    %1138 = vmatpush1.bf16.msra.mxu0 0
    %1139 = vmatprep.subr.bf16.mxu0 0
    %1140 = vmatpush1.bf16.msra.mxu0 0
    %1141 = vmatprep.subr.bf16.mxu0 0
    %1142 = vmatpush1.bf16.msra.mxu0 0
    %1143 = vmatprep.subr.bf16.mxu0 0
    %1144 = vmatpush1.bf16.msra.mxu0 0
    %1145 = vmatprep.subr.bf16.mxu0 0
    %1146 = vmatpush1.bf16.msra.mxu0 0
    %1147 = vmatprep.subr.bf16.mxu0 0
    %1148 = vmatpush1.bf16.msra.mxu0 0
    %1149 = vmatprep.subr.bf16.mxu0 0
    %1150 = vmatpush1.bf16.msra.mxu0 0
    %1151 = vmatprep.subr.bf16.mxu0 0
    %1152 = vmatpush1.bf16.msra.mxu0 0
    %1153 = vmatprep.subr.bf16.mxu0 0
    %1154 = vmatpush1.bf16.msra.mxu0 0
    %1155 = vmatprep.subr.bf16.mxu0 0
    %1156 = vmatpush1.bf16.msra.mxu0 0
    %1157 = vmatprep.subr.bf16.mxu0 0
    %1158 = vmatpush1.bf16.msra.mxu0 0
    %1159 = vmatprep.mubr.bf16.mxu0 0
    %1160 = vmatmul.mubr.bf16.gmra.mrb[0].mxu0 %v1122
    %v1161 = vpop.f32.mrb[0].mxu0
    %v1162 = vadd.f32 %v1093, %v1161
    %v1163 = vpop.f32.mrb[0].mxu0
    %v1164 = vpop.f32.mrb[0].mxu0
    %v1165 = vadd.f32 %v1098, %v1164
    %v1166 = vpop.f32.mrb[0].mxu0
    %1167 = vmatprep.mubr.bf16.mxu0 0
    %1168 = vmatmul.mubr.bf16.gmra.mrb[0].mxu0 %v1125
    %v1169 = vpop.f32.mrb[0].mxu0
    %v1170 = vadd.f32 %v1103, %v1169
    %v1171 = vpop.f32.mrb[0].mxu0
    %v1172 = vpop.f32.mrb[0].mxu0
    %v1173 = vadd.f32 %v1108, %v1172
    %v1174 = vpop.f32.mrb[0].mxu0
    %1175 = vdwg.mxu0
    %v1176 = vmax.f32 %v1162, 0.0
    %v1177 = vmax.f32 %v1165, 0.0
    %v1178 = vmax.f32 %v1170, 0.0
    %v1179 = vmax.f32 %v1173, 0.0
    %v1180 = vld [vmem:[%s9] sm:$0xff]
    %v1181 = vld [vmem:[%s9 + $0x8] sm:$0xff]
    %v1182 = vld [vmem:[%s9 + $0x10] sm:$0xff]
    %v1183 = vld [vmem:[%s9 + $0x18] sm:$0xff]
    %1185 = vset.pattern.permute.xlu0 0
    %1186 = vperm.xlu0 %1185, %v1180
    %v1187 = vpop.permute.xlu0 %1186
    %1190 = vset.pattern.permute.xlu0 0
    %1191 = vperm.xlu0 %1190, %v1181
    %v1192 = vpop.permute.xlu0 %1191
    %1195 = vset.pattern.permute.xlu0 0
    %1196 = vperm.xlu0 %1195, %v1182
    %v1197 = vpop.permute.xlu0 %1196
    %1200 = vset.pattern.permute.xlu0 0
    %1201 = vperm.xlu0 %1200, %v1183
    %v1202 = vpop.permute.xlu0 %1201
    %v1204 = vmul.f32 %v1176, %v1187
    %v1205 = vmul.f32 %v1177, %v1192
    %v1206 = vmul.f32 %v1178, %v1197
    %v1207 = vmul.f32 %v1179, %v1202
    %v1208 = vadd.f32 %v1204, %v1205
    %v1209 = vadd.f32 %v1208, %v1206
    %v1210 = vadd.f32 %v1209, %v1207
    %v1211 = vrot.slane %v1210, 4
    %v1212 = vadd.f32 %v1210, %v1211
    %v1213 = vrot.slane %v1212, 2
    %v1214 = vadd.f32 %v1212, %v1213
    %v1215 = vrot.slane %v1214, 1
    %v1216 = vadd.f32 %v1214, %v1215
    %s1217 = sld [smem:[#allocation2]]
    %v1218 = vstv %s1217
    %v1219 = vadd.f32 %v1216, %v1218
    %v1220 = vxor.u32 %v1219, 2147483648
    %v1221 = vmul.f32 %v1220, 1.442695
    %v1222 = vpow.pop %v1221
    %v1223 = vadd.f32 %v1222, 1.0
    %v1224 = vrcp.pop %v1223
    %v1225 = vmul.f32 1.0, %v1224
    %v1226 = vmul.f32 %v1225, 3.0
    %1227 = vst [vmem:[#allocation3] sm:$0x1] %v1226
    // Predicated region
    $region46: #{tpu_custom_call.1} parent=1 // pred_check
      _
    $region47: #{tpu_custom_call.1} parent=1 // pred_check_branch
      %1229 = sbr.rel (0) target = $region49
    $region48: #{tpu_custom_call.1} parent=1 // pred_region
      %s1231 = ssub.s32 16, 16
      %1232 = vsyncadd [#allocation4], %s1231
      %s1234 = sshll.u32 [#allocation3], 4
      %s1235 = int_to_ptr.vmem [resolvable:$true] %s1234
      %1237 = dma.vmem_to_hbm [thread:$0]  %s1235, 16, %s11, [#allocation4]
    $region49: #{tpu_custom_call.1} parent=1 // pred_fallthru
      _
    // Predicated region
    $region50: #{tpu_custom_call.1} parent=1 // pred_check
      _
    $region51: #{tpu_custom_call.1} parent=1 // pred_check_branch
      %1239 = sbr.rel (0) target = $region53
    $region52: #{tpu_custom_call.1} parent=1 // pred_region
      %1240 = dma.done [#allocation4], 16
    $region53: #{tpu_custom_call.1} parent=1 // pred_fallthru
      _
    %1241 = vsyncpa [#allocation4], 1

</llo_original>
